<compile_context>
chip_gen: v5e
topology: v5e:2x2
jax: 0.10.0
libtpu: 0.0.40
codegen_flags: <defaults>
</compile_context>

<pallas_src>
import functools

import jax
import jax.numpy as jnp
from jax.experimental import pallas as pl
from jax.experimental.pallas import tpu as pltpu


def _rope_kernel(pos_ref, inv_ref, out_ref, *, attention_scaling):
    # pos_ref : (Ts, 1)    int32  -- positions for this row tile (sublane axis)
    # inv_ref : (1, half)  f32    -- inverse frequencies (shared across tiles)
    # out_ref : (Ts, 4*half)      -- fused [cos(emb) | sin(emb)] slab, out dtype
    pos = pos_ref[...].astype(jnp.float32)        # (Ts, 1)
    inv = inv_ref[...]                            # (1, half)
    freqs = pos * inv                             # (Ts, half) broadcast, no transpose

    cos = jnp.cos(freqs)                          # half-width transcendentals only
    sin = jnp.sin(freqs)
    if attention_scaling != 1.0:                  # statically elided for default rope
        cos = cos * attention_scaling
        sin = sin * attention_scaling
    cos = cos.astype(out_ref.dtype)               # cast once on half-width tensor
    sin = sin.astype(out_ref.dtype)

    # emb = cat(freqs, freqs) => cos(emb) = [cos|cos], sin(emb) = [sin|sin].
    # Single full-width (lane-dense) store of the fused slab.
    out_ref[...] = jnp.concatenate([cos, cos, sin, sin], axis=-1)


def llama_rotary_embedding(x, position_ids, inv_freq, attention_scaling=1.0,
                           row_tile=1024):
    """Pallas equivalent of LlamaRotaryEmbedding.forward.

    x            : array whose dtype determines output dtype (values unused)
    position_ids : [B, S] integer positions
    inv_freq     : [head_dim // 2] float32 inverse frequencies
    returns (cos, sin), each [B, S, head_dim] with dtype x.dtype
    """
    B, S = position_ids.shape
    half = inv_freq.shape[0]
    D = 2 * half
    out_dtype = x.dtype

    N = B * S
    Ts = min(row_tile, N)                         # tile rows of the flattened B*S axis
    grid = (pl.cdiv(N, Ts),)

    pos_rows = position_ids.reshape(N, 1).astype(jnp.int32)   # seq on sublane axis
    inv_f = inv_freq.astype(jnp.float32).reshape(1, half)

    kernel = functools.partial(
        _rope_kernel, attention_scaling=float(attention_scaling)
    )

    fused = pl.pallas_call(
        kernel,
        out_shape=jax.ShapeDtypeStruct((N, 2 * D), out_dtype),
        grid_spec=pltpu.PrefetchScalarGridSpec(
            num_scalar_prefetch=0,
            grid=grid,
            in_specs=[
                pl.BlockSpec((Ts, 1), lambda i: (i, 0)),      # positions (row tile)
                pl.BlockSpec((1, half), lambda i: (0, 0)),    # inv_freq (shared)
            ],
            out_specs=pl.BlockSpec((Ts, 2 * D), lambda i: (i, 0)),
        ),
        compiler_params=pltpu.CompilerParams(
            dimension_semantics=("parallel",),
            vmem_limit_bytes=32 * 1024 * 1024,
        ),
    )(pos_rows, inv_f)

    fused = fused.reshape(B, S, 2 * D)
    cos = fused[..., :D]
    sin = fused[..., D:]
    return cos, sin


def _reference(x, position_ids, inv_freq, attention_scaling=1.0):
    # Pure-JAX reference mirroring the PyTorch forward exactly.
    inv_exp = inv_freq[None, :, None].astype(jnp.float32)          # (1, half, 1)
    inv_exp = jnp.broadcast_to(inv_exp, (position_ids.shape[0],) + inv_exp.shape[1:])
    pos_exp = position_ids[:, None, :].astype(jnp.float32)         # (B, 1, S)
    freqs = jnp.swapaxes(inv_exp @ pos_exp, 1, 2)                  # (B, S, half)
    emb = jnp.concatenate([freqs, freqs], axis=-1)                 # (B, S, D)
    cos = jnp.cos(emb) * attention_scaling
    sin = jnp.sin(emb) * attention_scaling
    return cos.astype(x.dtype), sin.astype(x.dtype)


if __name__ == "__main__":
    # "Config": hidden=64 with 1 head -> head_dim (rotary dim) = 64,
    # rope_theta = 10000.0, default rope type -> attention_scaling = 1.0.
    B, S, HEAD_DIM, HIDDEN = 2, 8, 64, 64
    ROPE_THETA = 10000.0
    ATTN_SCALING = 1.0

    # Deterministic "default" rope init (ROPE_INIT_FUNCTIONS['default']):
    # inv_freq = 1 / theta**(arange(0, dim, 2)/dim)
    inv_freq = 1.0 / (
        ROPE_THETA ** (jnp.arange(0, HEAD_DIM, 2, dtype=jnp.float32) / HEAD_DIM)
    )

    key = jax.random.PRNGKey(0)
    kx, kp = jax.random.split(key)
    x = jax.random.normal(kx, (B, S, HIDDEN), dtype=jnp.float32)   # only dtype used
    position_ids = jax.random.randint(kp, (B, S), 0, 1024, dtype=jnp.int32)

    cos, sin = llama_rotary_embedding(x, position_ids, inv_freq, ATTN_SCALING)
    cos, sin = jax.block_until_ready((cos, sin))

    cos_ref, sin_ref = _reference(x, position_ids, inv_freq, ATTN_SCALING)
    assert cos.shape == (B, S, HEAD_DIM) and sin.shape == (B, S, HEAD_DIM)
    assert cos.dtype == x.dtype and sin.dtype == x.dtype
    assert jnp.allclose(cos, cos_ref, atol=1e-5, rtol=1e-5)
    assert jnp.allclose(sin, sin_ref, atol=1e-5, rtol=1e-5)

    print("KERNEL_OK")
</pallas_src>

<mosaic_0001>
module attributes {stable_mosaic.version = 11 : i64} {
  func.func @_rope_kernel(%arg0: i32, %arg1: memref<16x1xi32, #tpu.memory_space<vmem>>, %arg2: memref<1x32xf32, #tpu.memory_space<vmem>>, %arg3: memref<16x128xf32, #tpu.memory_space<vmem>>) attributes {dimension_semantics = [#tpu.dimension_semantics<parallel>], iteration_bounds = array<i64: 1>, scalar_prefetch = 0 : i64, scratch_operands = 0 : i64, tpu.core_type = #tpu.core_type<tc>, window_params = [{transform_indices = @transform_0, window_bounds = array<i64: 16, 1>}, {pipeline_mode = #tpu.pipeline_mode<synchronous>, transform_indices = @transform_1, window_bounds = array<i64: 1, 32>}, {transform_indices = @transform_2, window_bounds = array<i64: 16, 128>}]} {
    %c0 = arith.constant 0 : index
    %c0_0 = arith.constant 0 : index
    %0 = vector.load %arg1[%c0, %c0_0] : memref<16x1xi32, #tpu.memory_space<vmem>>, vector<16x1xi32>
    %1 = arith.sitofp %0 : vector<16x1xi32> to vector<16x1xf32>
    %c0_1 = arith.constant 0 : index
    %c0_2 = arith.constant 0 : index
    %2 = vector.load %arg2[%c0_1, %c0_2] : memref<1x32xf32, #tpu.memory_space<vmem>>, vector<1x32xf32>
    %3 = vector.broadcast %1 : vector<16x1xf32> to vector<16x32xf32>
    %4 = vector.broadcast %2 : vector<1x32xf32> to vector<16x32xf32>
    %5 = arith.mulf %3, %4 : vector<16x32xf32>
    %6 = math.cos %5 : vector<16x32xf32>
    %7 = math.sin %5 : vector<16x32xf32>
    %8 = tpu.concatenate %6, %6, %7, %7 in 1 : vector<16x32xf32>, vector<16x32xf32>, vector<16x32xf32>, vector<16x32xf32> -> vector<16x128xf32>
    %c0_3 = arith.constant 0 : index
    %c0_4 = arith.constant 0 : index
    %9 = vector.load %arg3[%c0_3, %c0_4] : memref<16x128xf32, #tpu.memory_space<vmem>>, vector<16x128xf32>
    tpu.vector_store %arg3[%c0_3, %c0_4], %8 {strides = array<i32>} : memref<16x128xf32, #tpu.memory_space<vmem>>, vector<16x128xf32>,
    return
  }
  func.func @transform_0(%arg0: i32) -> (i32, i32) {
    %c0_i32 = arith.constant 0 : i32
    %c0_i32_0 = arith.constant 0 : i32
    return %arg0, %c0_i32 : i32, i32
  }
  func.func @transform_1(%arg0: i32) -> (i32, i32) {
    %c0_i32 = arith.constant 0 : i32
    %c0_i32_0 = arith.constant 0 : i32
    %c0_i32_1 = arith.constant 0 : i32
    return %c0_i32, %c0_i32_0 : i32, i32
  }
  func.func @transform_2(%arg0: i32) -> (i32, i32) {
    %c0_i32 = arith.constant 0 : i32
    %c0_i32_0 = arith.constant 0 : i32
    return %arg0, %c0_i32 : i32, i32
  }
}

</mosaic_0001>

<llo_original>
// kernel: tpu_custom_call.1
$region0: #{tpu_custom_call.1}
  #allocation0 [shape = 'u32[]', space=smem, size = 0x4, offset = 0x4, fixed_abs, tag = 'smem constant byte address 0x4 - core index']
  #allocation1 [shape = 'u32[72,128]{1,0:T(1,128)}', space=vmem, size = 0x9000, scoped, tag = 'internal scratch']
  %s0 = inlined_call_operand.vmem [shape: s32[16,1], index: 0, kind: input, shape index: {}]
  %s1 = inlined_call_operand.vmem [shape: f32[1,32], index: 1, kind: input, shape index: {}]
  %s2 = inlined_call_operand.hbm [shape: f32[16,128], index: 2, kind: output, shape index: {}]
  %s3 = sld [smem:[#allocation0]]
  $region18: #{tpu_custom_call.1} parent=0
    _
  %s5 = ssub.s32 1, %s3
  %s6 = scalar_select 0, %s5, %s3
  $region1: #{tpu_custom_call.1} parent=0
    #allocation2 [shape = 'u8[8192]{0}', space=vmem, size = 0x2000, scoped, tag = 'output window, operand 0, single buffered']
    #allocation3 [shape = 's32[1]{0}', space=sflag, size = 0x4, scoped, tag = 'scoped memory for tpu_custom_call.1']
    %7 = vsyncpa [#allocation3], 0
    // Predicated region
    $region2: #{tpu_custom_call.1} parent=1 // pred_check
      _
    $region3: #{tpu_custom_call.1} parent=1 // pred_check_branch
      %9 = sbr.rel (0) target = $region5
    $region4: #{tpu_custom_call.1} parent=1 // pred_region
      _
    $region5: #{tpu_custom_call.1} parent=1 // pred_fallthru
      _
    // Predicated region
    $region6: #{tpu_custom_call.1} parent=1 // pred_check
      _
    $region7: #{tpu_custom_call.1} parent=1 // pred_check_branch
      %11 = sbr.rel (0) target = $region9
    $region8: #{tpu_custom_call.1} parent=1 // pred_region
      _
    $region9: #{tpu_custom_call.1} parent=1 // pred_fallthru
      _
    %v12 = vld [vmem:[%s0] sm:$0xff]
    %v13 = vld [vmem:[%s0 + $0x8] sm:$0xff]
    %v14 = vcvt.s32.f32 %v12
    %v15 = vcvt.s32.f32 %v13
    %v16 = vld [vmem:[%s1] sm:$0x1]
    %18 = vset.pattern.permute.xlu0 0
    %19 = vperm.xlu0 %18, %v14
    %v20 = vpop.permute.xlu0 %19
    %23 = vset.pattern.permute.xlu0 0
    %24 = vperm.xlu0 %23, %v15
    %v25 = vpop.permute.xlu0 %24
    %v28 = vperm.slane %v16, 0
    %v30 = vmul.f32 %v20, %v28
    %v31 = vmul.f32 %v25, %v28
    %v32 = vand.u32 2147483647, %v30
    %vm33 = vcmp.le.f32.partialorder %v32, 0.7853982
    %vm34 = vcmp.lt.s32.totalorder %v30, 0
    %v35 = vand.u32 %v30, 2139095040
    %v36 = vshrl.u32 %v35, 23
    %v37 = vsub.s32 %v36, 127
    %v38 = vand.u32 2147483647, %v30
    %v39 = vand.u32 %v38, 8388607
    %v40 = vor.u32 %v39, 8388608
    %v41 = vsub.s32 0, %v40
    %v42 = vadd.s32 %v37, 1
    %vm43 = vcmp.gt.s32.totalorder %v42, 0
    %v44 = vsel %vm43, %v42, 0
    %v45 = vshrl.u32 %v44, 5
    %v46 = vand.u32 %v44, 31
    %v47 = vsub.s32 32, %v46
    %v48 = vshrl.u32 683565275, %v47
    %v49 = vshll.u32 683565275, %v46
    %v50 = vshrl.u32 2475754826, %v47
    %v51 = vor.u32 %v49, %v50
    %v52 = vshll.u32 2475754826, %v46
    %v53 = vshrl.u32 2131351028, %v47
    %v54 = vor.u32 %v52, %v53
    %v55 = vshll.u32 2131351028, %v46
    %v56 = vshrl.u32 2102212464, %v47
    %v57 = vor.u32 %v55, %v56
    %v58 = vshll.u32 2102212464, %v46
    %v59 = vshrl.u32 920167782, %v47
    %v60 = vor.u32 %v58, %v59
    %v61 = vshll.u32 920167782, %v46
    %v62 = vshrl.u32 1326507024, %v47
    %v63 = vor.u32 %v61, %v62
    %vm64 = vcmp.lt.s32.totalorder %v45, 1
    %vm65 = vcmp.lt.s32.totalorder %v45, 2
    %vm66 = vcmp.lt.s32.totalorder %v45, 3
    %vm67 = vcmp.lt.s32.totalorder %v45, 4
    %v68 = vsel %vm64, %v48, %v51
    %v69 = vsel %vm67, %v57, 2102212464
    %v70 = vsel %vm66, %v54, %v69
    %v71 = vsel %vm65, %v68, %v70
    %v72 = vsel %vm64, %v51, %v54
    %v73 = vsel %vm67, %v60, 920167782
    %v74 = vsel %vm66, %v57, %v73
    %v75 = vsel %vm65, %v72, %v74
    %v76 = vsel %vm64, %v54, %v57
    %v77 = vsel %vm67, %v63, 1326507024
    %v78 = vsel %vm66, %v60, %v77
    %v79 = vsel %vm65, %v76, %v78
    %v80 = vshll.u32 %v40, 8
    %v81 = vand.u32 %v80, 65535
    %v82 = vshrl.u32 %v80, 16
    %v83 = vand.u32 %v79, 65535
    %v84 = vshrl.u32 %v79, 16
    %v85 = vmul.u32 %v81, %v83
    %v86 = vmul.u32 %v81, %v84
    %v87 = vmul.u32 %v82, %v83
    %v88 = vmul.u32 %v82, %v84
    %v89 = vshll.u32 %v86, 16
    %v90 = vshrl.u32 %v86, 16
    %v91 = vshll.u32 %v87, 16
    %v92 = vshrl.u32 %v87, 16
    %vm93 = vc.u32 %v85, %v89
    %v94 = vsel %vm93, 1, 0
    %v95 = vadd.s32 %v85, %v89
    %v96 = vadd.s32 %v88, %v94
    %vm97 = vc.u32 %v95, %v91
    %v98 = vsel %vm97, 1, 0
    %v99 = vadd.s32 %v95, %v91
    %v100 = vadd.s32 %v96, %v98
    %v101 = vadd.s32 %v100, %v90
    %v102 = vadd.s32 %v101, %v92
    %v103 = vand.u32 %v80, 65535
    %v104 = vshrl.u32 %v80, 16
    %v105 = vand.u32 %v75, 65535
    %v106 = vshrl.u32 %v75, 16
    %v107 = vmul.u32 %v103, %v105
    %v108 = vmul.u32 %v103, %v106
    %v109 = vmul.u32 %v104, %v105
    %v110 = vmul.u32 %v104, %v106
    %v111 = vshll.u32 %v108, 16
    %v112 = vshrl.u32 %v108, 16
    %v113 = vshll.u32 %v109, 16
    %v114 = vshrl.u32 %v109, 16
    %vm115 = vc.u32 %v107, %v111
    %v116 = vsel %vm115, 1, 0
    %v117 = vadd.s32 %v107, %v111
    %v118 = vadd.s32 %v110, %v116
    %vm119 = vc.u32 %v117, %v113
    %v120 = vsel %vm119, 1, 0
    %v121 = vadd.s32 %v117, %v113
    %v122 = vadd.s32 %v118, %v120
    %v123 = vadd.s32 %v122, %v112
    %v124 = vadd.s32 %v123, %v114
    %v125 = vmul.u32 %v80, %v71
    %v126 = vadd.s32 %v102, %v121
    %vm127 = vc.u32 %v102, %v121
    %v128 = vadd.s32 %v124, 1
    %v129 = vsel %vm127, %v128, %v124
    %v130 = vadd.s32 %v125, %v129
    %v131 = vadd.s32 %v130, 536870912
    %v132 = vshrl.u32 %v131, 30
    %v133 = vshll.u32 %v132, 30
    %v134 = vsub.s32 %v130, %v133
    %vm135 = vcmp.lt.s32.totalorder %v134, 0
    %v136 = vsub.s32 0, %v134
    %v137 = vsel %vm135, %v136, %v134
    %v138 = vclz %v137
    %v139 = vsub.s32 %v138, 2
    %vm140 = vcmp.gt.s32.totalorder 0, %v139
    %v141 = vsel %vm140, 0, %v139
    %v142 = vsub.s32 32, %v141
    %v143 = vshll.u32 %v134, %v141
    %v144 = vshrl.u32 %v126, %v142
    %v145 = vor.u32 %v143, %v144
    %v146 = vsub.s32 4294967266, %v141
    %v147 = vadd.s32 %v146, 127
    %v148 = vshll.u32 %v147, 23
    %v149 = vor.u32 4788187, %v148
    %v150 = vand.u32 2147483647, %v149
    %v152 = vcvt.s32.f32 %v145
    %v153 = vmul.f32 %v152, %v150
    %v154 = vxor.u32 %v153, 2147483648
    %v155 = vsel %vm34, %v154, %v153
    %v156 = vsub.s32 4, %v132
    %v157 = vsel %vm34, %v156, %v132
    %v158 = vsel %vm33, %v30, %v155
    %v159 = vsel %vm33, 0, %v157
    %v160 = vmul.f32 %v158, %v158
    %v161 = vmul.f32 %v160, -0.001358992
    %v162 = vadd.f32 %v161, 0.041655596
    %v163 = vmul.f32 %v160, %v162
    %v164 = vadd.f32 %v163, -0.4999988
    %v165 = vmul.f32 %v160, %v164
    %v166 = vadd.f32 1.0, %v165
    %v167 = vmul.f32 %v158, %v158
    %v168 = vmul.f32 %v167, -0.00019511016
    %v169 = vadd.f32 %v168, 0.008332121
    %v170 = vmul.f32 %v167, %v169
    %v171 = vadd.f32 %v170, -0.16666654
    %v172 = vmul.f32 %v167, %v171
    %v173 = vadd.f32 %v172, 1.0
    %v174 = vmul.f32 %v173, %v158
    %vm175 = vweird.f32 %v30
    %v176 = vand.u32 %v159, 3
    %vm177 = vcmp.lt.s32.totalorder %v176, 2
    %vm178 = vcmp.eq.s32.totalorder %v176, 0
    %v179 = vxor.u32 %v174, 2147483648
    %v180 = vsel %vm178, %v166, %v179
    %vm181 = vcmp.eq.s32.totalorder %v176, 2
    %v182 = vxor.u32 %v166, 2147483648
    %v183 = vsel %vm181, %v182, %v174
    %v184 = vsel %vm177, %v180, %v183
    %v185 = vsel %vm175, nan, %v184
    %v186 = vand.u32 2147483647, %v31
    %vm187 = vcmp.le.f32.partialorder %v186, 0.7853982
    %vm188 = vcmp.lt.s32.totalorder %v31, 0
    %v189 = vand.u32 %v31, 2139095040
    %v190 = vshrl.u32 %v189, 23
    %v191 = vsub.s32 %v190, 127
    %v192 = vand.u32 2147483647, %v31
    %v193 = vand.u32 %v192, 8388607
    %v194 = vor.u32 %v193, 8388608
    %v195 = vsub.s32 0, %v194
    %v196 = vadd.s32 %v191, 1
    %vm197 = vcmp.gt.s32.totalorder %v196, 0
    %v198 = vsel %vm197, %v196, 0
    %v199 = vshrl.u32 %v198, 5
    %v200 = vand.u32 %v198, 31
    %v201 = vsub.s32 32, %v200
    %v202 = vshrl.u32 683565275, %v201
    %v203 = vshll.u32 683565275, %v200
    %v204 = vshrl.u32 2475754826, %v201
    %v205 = vor.u32 %v203, %v204
    %v206 = vshll.u32 2475754826, %v200
    %v207 = vshrl.u32 2131351028, %v201
    %v208 = vor.u32 %v206, %v207
    %v209 = vshll.u32 2131351028, %v200
    %v210 = vshrl.u32 2102212464, %v201
    %v211 = vor.u32 %v209, %v210
    %v212 = vshll.u32 2102212464, %v200
    %v213 = vshrl.u32 920167782, %v201
    %v214 = vor.u32 %v212, %v213
    %v215 = vshll.u32 920167782, %v200
    %v216 = vshrl.u32 1326507024, %v201
    %v217 = vor.u32 %v215, %v216
    %vm218 = vcmp.lt.s32.totalorder %v199, 1
    %vm219 = vcmp.lt.s32.totalorder %v199, 2
    %vm220 = vcmp.lt.s32.totalorder %v199, 3
    %vm221 = vcmp.lt.s32.totalorder %v199, 4
    %v222 = vsel %vm218, %v202, %v205
    %v223 = vsel %vm221, %v211, 2102212464
    %v224 = vsel %vm220, %v208, %v223
    %v225 = vsel %vm219, %v222, %v224
    %v226 = vsel %vm218, %v205, %v208
    %v227 = vsel %vm221, %v214, 920167782
    %v228 = vsel %vm220, %v211, %v227
    %v229 = vsel %vm219, %v226, %v228
    %v230 = vsel %vm218, %v208, %v211
    %v231 = vsel %vm221, %v217, 1326507024
    %v232 = vsel %vm220, %v214, %v231
    %v233 = vsel %vm219, %v230, %v232
    %v234 = vshll.u32 %v194, 8
    %v235 = vand.u32 %v234, 65535
    %v236 = vshrl.u32 %v234, 16
    %v237 = vand.u32 %v233, 65535
    %v238 = vshrl.u32 %v233, 16
    %v239 = vmul.u32 %v235, %v237
    %v240 = vmul.u32 %v235, %v238
    %v241 = vmul.u32 %v236, %v237
    %v242 = vmul.u32 %v236, %v238
    %v243 = vshll.u32 %v240, 16
    %v244 = vshrl.u32 %v240, 16
    %v245 = vshll.u32 %v241, 16
    %v246 = vshrl.u32 %v241, 16
    %vm247 = vc.u32 %v239, %v243
    %v248 = vsel %vm247, 1, 0
    %v249 = vadd.s32 %v239, %v243
    %v250 = vadd.s32 %v242, %v248
    %vm251 = vc.u32 %v249, %v245
    %v252 = vsel %vm251, 1, 0
    %v253 = vadd.s32 %v249, %v245
    %v254 = vadd.s32 %v250, %v252
    %v255 = vadd.s32 %v254, %v244
    %v256 = vadd.s32 %v255, %v246
    %v257 = vand.u32 %v234, 65535
    %v258 = vshrl.u32 %v234, 16
    %v259 = vand.u32 %v229, 65535
    %v260 = vshrl.u32 %v229, 16
    %v261 = vmul.u32 %v257, %v259
    %v262 = vmul.u32 %v257, %v260
    %v263 = vmul.u32 %v258, %v259
    %v264 = vmul.u32 %v258, %v260
    %v265 = vshll.u32 %v262, 16
    %v266 = vshrl.u32 %v262, 16
    %v267 = vshll.u32 %v263, 16
    %v268 = vshrl.u32 %v263, 16
    %vm269 = vc.u32 %v261, %v265
    %v270 = vsel %vm269, 1, 0
    %v271 = vadd.s32 %v261, %v265
    %v272 = vadd.s32 %v264, %v270
    %vm273 = vc.u32 %v271, %v267
    %v274 = vsel %vm273, 1, 0
    %v275 = vadd.s32 %v271, %v267
    %v276 = vadd.s32 %v272, %v274
    %v277 = vadd.s32 %v276, %v266
    %v278 = vadd.s32 %v277, %v268
    %v279 = vmul.u32 %v234, %v225
    %v280 = vadd.s32 %v256, %v275
    %vm281 = vc.u32 %v256, %v275
    %v282 = vadd.s32 %v278, 1
    %v283 = vsel %vm281, %v282, %v278
    %v284 = vadd.s32 %v279, %v283
    %v285 = vadd.s32 %v284, 536870912
    %v286 = vshrl.u32 %v285, 30
    %v287 = vshll.u32 %v286, 30
    %v288 = vsub.s32 %v284, %v287
    %vm289 = vcmp.lt.s32.totalorder %v288, 0
    %v290 = vsub.s32 0, %v288
    %v291 = vsel %vm289, %v290, %v288
    %v292 = vclz %v291
    %v293 = vsub.s32 %v292, 2
    %vm294 = vcmp.gt.s32.totalorder 0, %v293
    %v295 = vsel %vm294, 0, %v293
    %v296 = vsub.s32 32, %v295
    %v297 = vshll.u32 %v288, %v295
    %v298 = vshrl.u32 %v280, %v296
    %v299 = vor.u32 %v297, %v298
    %v300 = vsub.s32 4294967266, %v295
    %v301 = vadd.s32 %v300, 127
    %v302 = vshll.u32 %v301, 23
    %v303 = vor.u32 4788187, %v302
    %v304 = vand.u32 2147483647, %v303
    %v306 = vcvt.s32.f32 %v299
    %v307 = vmul.f32 %v306, %v304
    %v308 = vxor.u32 %v307, 2147483648
    %v309 = vsel %vm188, %v308, %v307
    %v310 = vsub.s32 4, %v286
    %v311 = vsel %vm188, %v310, %v286
    %v312 = vsel %vm187, %v31, %v309
    %v313 = vsel %vm187, 0, %v311
    %v314 = vmul.f32 %v312, %v312
    %v315 = vmul.f32 %v314, -0.001358992
    %v316 = vadd.f32 %v315, 0.041655596
    %v317 = vmul.f32 %v314, %v316
    %v318 = vadd.f32 %v317, -0.4999988
    %v319 = vmul.f32 %v314, %v318
    %v320 = vadd.f32 1.0, %v319
    %v321 = vmul.f32 %v312, %v312
    %v322 = vmul.f32 %v321, -0.00019511016
    %v323 = vadd.f32 %v322, 0.008332121
    %v324 = vmul.f32 %v321, %v323
    %v325 = vadd.f32 %v324, -0.16666654
    %v326 = vmul.f32 %v321, %v325
    %v327 = vadd.f32 %v326, 1.0
    %v328 = vmul.f32 %v327, %v312
    %vm329 = vweird.f32 %v31
    %v330 = vand.u32 %v313, 3
    %vm331 = vcmp.lt.s32.totalorder %v330, 2
    %vm332 = vcmp.eq.s32.totalorder %v330, 0
    %v333 = vxor.u32 %v328, 2147483648
    %v334 = vsel %vm332, %v320, %v333
    %vm335 = vcmp.eq.s32.totalorder %v330, 2
    %v336 = vxor.u32 %v320, 2147483648
    %v337 = vsel %vm335, %v336, %v328
    %v338 = vsel %vm331, %v334, %v337
    %v339 = vsel %vm329, nan, %v338
    %v340 = vand.u32 2147483647, %v30
    %vm341 = vcmp.le.f32.partialorder %v340, 0.7853982
    %vm342 = vcmp.lt.s32.totalorder %v30, 0
    %v343 = vand.u32 %v30, 2139095040
    %v344 = vshrl.u32 %v343, 23
    %v345 = vsub.s32 %v344, 127
    %v346 = vand.u32 2147483647, %v30
    %v347 = vand.u32 %v346, 8388607
    %v348 = vor.u32 %v347, 8388608
    %v349 = vsub.s32 0, %v348
    %v350 = vadd.s32 %v345, 1
    %vm351 = vcmp.gt.s32.totalorder %v350, 0
    %v352 = vsel %vm351, %v350, 0
    %v353 = vshrl.u32 %v352, 5
    %v354 = vand.u32 %v352, 31
    %v355 = vsub.s32 32, %v354
    %v356 = vshrl.u32 683565275, %v355
    %v357 = vshll.u32 683565275, %v354
    %v358 = vshrl.u32 2475754826, %v355
    %v359 = vor.u32 %v357, %v358
    %v360 = vshll.u32 2475754826, %v354
    %v361 = vshrl.u32 2131351028, %v355
    %v362 = vor.u32 %v360, %v361
    %v363 = vshll.u32 2131351028, %v354
    %v364 = vshrl.u32 2102212464, %v355
    %v365 = vor.u32 %v363, %v364
    %v366 = vshll.u32 2102212464, %v354
    %v367 = vshrl.u32 920167782, %v355
    %v368 = vor.u32 %v366, %v367
    %v369 = vshll.u32 920167782, %v354
    %v370 = vshrl.u32 1326507024, %v355
    %v371 = vor.u32 %v369, %v370
    %vm372 = vcmp.lt.s32.totalorder %v353, 1
    %vm373 = vcmp.lt.s32.totalorder %v353, 2
    %vm374 = vcmp.lt.s32.totalorder %v353, 3
    %vm375 = vcmp.lt.s32.totalorder %v353, 4
    %v376 = vsel %vm372, %v356, %v359
    %v377 = vsel %vm375, %v365, 2102212464
    %v378 = vsel %vm374, %v362, %v377
    %v379 = vsel %vm373, %v376, %v378
    %v380 = vsel %vm372, %v359, %v362
    %v381 = vsel %vm375, %v368, 920167782
    %v382 = vsel %vm374, %v365, %v381
    %v383 = vsel %vm373, %v380, %v382
    %v384 = vsel %vm372, %v362, %v365
    %v385 = vsel %vm375, %v371, 1326507024
    %v386 = vsel %vm374, %v368, %v385
    %v387 = vsel %vm373, %v384, %v386
    %v388 = vshll.u32 %v348, 8
    %v389 = vand.u32 %v388, 65535
    %v390 = vshrl.u32 %v388, 16
    %v391 = vand.u32 %v387, 65535
    %v392 = vshrl.u32 %v387, 16
    %v393 = vmul.u32 %v389, %v391
    %v394 = vmul.u32 %v389, %v392
    %v395 = vmul.u32 %v390, %v391
    %v396 = vmul.u32 %v390, %v392
    %v397 = vshll.u32 %v394, 16
    %v398 = vshrl.u32 %v394, 16
    %v399 = vshll.u32 %v395, 16
    %v400 = vshrl.u32 %v395, 16
    %vm401 = vc.u32 %v393, %v397
    %v402 = vsel %vm401, 1, 0
    %v403 = vadd.s32 %v393, %v397
    %v404 = vadd.s32 %v396, %v402
    %vm405 = vc.u32 %v403, %v399
    %v406 = vsel %vm405, 1, 0
    %v407 = vadd.s32 %v403, %v399
    %v408 = vadd.s32 %v404, %v406
    %v409 = vadd.s32 %v408, %v398
    %v410 = vadd.s32 %v409, %v400
    %v411 = vand.u32 %v388, 65535
    %v412 = vshrl.u32 %v388, 16
    %v413 = vand.u32 %v383, 65535
    %v414 = vshrl.u32 %v383, 16
    %v415 = vmul.u32 %v411, %v413
    %v416 = vmul.u32 %v411, %v414
    %v417 = vmul.u32 %v412, %v413
    %v418 = vmul.u32 %v412, %v414
    %v419 = vshll.u32 %v416, 16
    %v420 = vshrl.u32 %v416, 16
    %v421 = vshll.u32 %v417, 16
    %v422 = vshrl.u32 %v417, 16
    %vm423 = vc.u32 %v415, %v419
    %v424 = vsel %vm423, 1, 0
    %v425 = vadd.s32 %v415, %v419
    %v426 = vadd.s32 %v418, %v424
    %vm427 = vc.u32 %v425, %v421
    %v428 = vsel %vm427, 1, 0
    %v429 = vadd.s32 %v425, %v421
    %v430 = vadd.s32 %v426, %v428
    %v431 = vadd.s32 %v430, %v420
    %v432 = vadd.s32 %v431, %v422
    %v433 = vmul.u32 %v388, %v379
    %v434 = vadd.s32 %v410, %v429
    %vm435 = vc.u32 %v410, %v429
    %v436 = vadd.s32 %v432, 1
    %v437 = vsel %vm435, %v436, %v432
    %v438 = vadd.s32 %v433, %v437
    %v439 = vadd.s32 %v438, 536870912
    %v440 = vshrl.u32 %v439, 30
    %v441 = vshll.u32 %v440, 30
    %v442 = vsub.s32 %v438, %v441
    %vm443 = vcmp.lt.s32.totalorder %v442, 0
    %v444 = vsub.s32 0, %v442
    %v445 = vsel %vm443, %v444, %v442
    %v446 = vclz %v445
    %v447 = vsub.s32 %v446, 2
    %vm448 = vcmp.gt.s32.totalorder 0, %v447
    %v449 = vsel %vm448, 0, %v447
    %v450 = vsub.s32 32, %v449
    %v451 = vshll.u32 %v442, %v449
    %v452 = vshrl.u32 %v434, %v450
    %v453 = vor.u32 %v451, %v452
    %v454 = vsub.s32 4294967266, %v449
    %v455 = vadd.s32 %v454, 127
    %v456 = vshll.u32 %v455, 23
    %v457 = vor.u32 4788187, %v456
    %v458 = vand.u32 2147483647, %v457
    %v460 = vcvt.s32.f32 %v453
    %v461 = vmul.f32 %v460, %v458
    %v462 = vxor.u32 %v461, 2147483648
    %v463 = vsel %vm342, %v462, %v461
    %v464 = vsub.s32 4, %v440
    %v465 = vsel %vm342, %v464, %v440
    %v466 = vsel %vm341, %v30, %v463
    %v467 = vsel %vm341, 0, %v465
    %v468 = vmul.f32 %v466, %v466
    %v469 = vmul.f32 %v468, -0.001358992
    %v470 = vadd.f32 %v469, 0.041655596
    %v471 = vmul.f32 %v468, %v470
    %v472 = vadd.f32 %v471, -0.4999988
    %v473 = vmul.f32 %v468, %v472
    %v474 = vadd.f32 1.0, %v473
    %v475 = vmul.f32 %v466, %v466
    %v476 = vmul.f32 %v475, -0.00019511016
    %v477 = vadd.f32 %v476, 0.008332121
    %v478 = vmul.f32 %v475, %v477
    %v479 = vadd.f32 %v478, -0.16666654
    %v480 = vmul.f32 %v475, %v479
    %v481 = vadd.f32 %v480, 1.0
    %v482 = vmul.f32 %v481, %v466
    %vm483 = vweird.f32 %v30
    %v484 = vadd.s32 %v467, 3
    %v485 = vand.u32 %v484, 3
    %vm486 = vcmp.lt.s32.totalorder %v485, 2
    %vm487 = vcmp.eq.s32.totalorder %v485, 0
    %v488 = vxor.u32 %v482, 2147483648
    %v489 = vsel %vm487, %v474, %v488
    %vm490 = vcmp.eq.s32.totalorder %v485, 2
    %v491 = vxor.u32 %v474, 2147483648
    %v492 = vsel %vm490, %v491, %v482
    %v493 = vsel %vm486, %v489, %v492
    %v494 = vsel %vm483, nan, %v493
    %v495 = vand.u32 2147483647, %v31
    %vm496 = vcmp.le.f32.partialorder %v495, 0.7853982
    %vm497 = vcmp.lt.s32.totalorder %v31, 0
    %v498 = vand.u32 %v31, 2139095040
    %v499 = vshrl.u32 %v498, 23
    %v500 = vsub.s32 %v499, 127
    %v501 = vand.u32 2147483647, %v31
    %v502 = vand.u32 %v501, 8388607
    %v503 = vor.u32 %v502, 8388608
    %v504 = vsub.s32 0, %v503
    %v505 = vadd.s32 %v500, 1
    %vm506 = vcmp.gt.s32.totalorder %v505, 0
    %v507 = vsel %vm506, %v505, 0
    %v508 = vshrl.u32 %v507, 5
    %v509 = vand.u32 %v507, 31
    %v510 = vsub.s32 32, %v509
    %v511 = vshrl.u32 683565275, %v510
    %v512 = vshll.u32 683565275, %v509
    %v513 = vshrl.u32 2475754826, %v510
    %v514 = vor.u32 %v512, %v513
    %v515 = vshll.u32 2475754826, %v509
    %v516 = vshrl.u32 2131351028, %v510
    %v517 = vor.u32 %v515, %v516
    %v518 = vshll.u32 2131351028, %v509
    %v519 = vshrl.u32 2102212464, %v510
    %v520 = vor.u32 %v518, %v519
    %v521 = vshll.u32 2102212464, %v509
    %v522 = vshrl.u32 920167782, %v510
    %v523 = vor.u32 %v521, %v522
    %v524 = vshll.u32 920167782, %v509
    %v525 = vshrl.u32 1326507024, %v510
    %v526 = vor.u32 %v524, %v525
    %vm527 = vcmp.lt.s32.totalorder %v508, 1
    %vm528 = vcmp.lt.s32.totalorder %v508, 2
    %vm529 = vcmp.lt.s32.totalorder %v508, 3
    %vm530 = vcmp.lt.s32.totalorder %v508, 4
    %v531 = vsel %vm527, %v511, %v514
    %v532 = vsel %vm530, %v520, 2102212464
    %v533 = vsel %vm529, %v517, %v532
    %v534 = vsel %vm528, %v531, %v533
    %v535 = vsel %vm527, %v514, %v517
    %v536 = vsel %vm530, %v523, 920167782
    %v537 = vsel %vm529, %v520, %v536
    %v538 = vsel %vm528, %v535, %v537
    %v539 = vsel %vm527, %v517, %v520
    %v540 = vsel %vm530, %v526, 1326507024
    %v541 = vsel %vm529, %v523, %v540
    %v542 = vsel %vm528, %v539, %v541
    %v543 = vshll.u32 %v503, 8
    %v544 = vand.u32 %v543, 65535
    %v545 = vshrl.u32 %v543, 16
    %v546 = vand.u32 %v542, 65535
    %v547 = vshrl.u32 %v542, 16
    %v548 = vmul.u32 %v544, %v546
    %v549 = vmul.u32 %v544, %v547
    %v550 = vmul.u32 %v545, %v546
    %v551 = vmul.u32 %v545, %v547
    %v552 = vshll.u32 %v549, 16
    %v553 = vshrl.u32 %v549, 16
    %v554 = vshll.u32 %v550, 16
    %v555 = vshrl.u32 %v550, 16
    %vm556 = vc.u32 %v548, %v552
    %v557 = vsel %vm556, 1, 0
    %v558 = vadd.s32 %v548, %v552
    %v559 = vadd.s32 %v551, %v557
    %vm560 = vc.u32 %v558, %v554
    %v561 = vsel %vm560, 1, 0
    %v562 = vadd.s32 %v558, %v554
    %v563 = vadd.s32 %v559, %v561
    %v564 = vadd.s32 %v563, %v553
    %v565 = vadd.s32 %v564, %v555
    %v566 = vand.u32 %v543, 65535
    %v567 = vshrl.u32 %v543, 16
    %v568 = vand.u32 %v538, 65535
    %v569 = vshrl.u32 %v538, 16
    %v570 = vmul.u32 %v566, %v568
    %v571 = vmul.u32 %v566, %v569
    %v572 = vmul.u32 %v567, %v568
    %v573 = vmul.u32 %v567, %v569
    %v574 = vshll.u32 %v571, 16
    %v575 = vshrl.u32 %v571, 16
    %v576 = vshll.u32 %v572, 16
    %v577 = vshrl.u32 %v572, 16
    %vm578 = vc.u32 %v570, %v574
    %v579 = vsel %vm578, 1, 0
    %v580 = vadd.s32 %v570, %v574
    %v581 = vadd.s32 %v573, %v579
    %vm582 = vc.u32 %v580, %v576
    %v583 = vsel %vm582, 1, 0
    %v584 = vadd.s32 %v580, %v576
    %v585 = vadd.s32 %v581, %v583
    %v586 = vadd.s32 %v585, %v575
    %v587 = vadd.s32 %v586, %v577
    %v588 = vmul.u32 %v543, %v534
    %v589 = vadd.s32 %v565, %v584
    %vm590 = vc.u32 %v565, %v584
    %v591 = vadd.s32 %v587, 1
    %v592 = vsel %vm590, %v591, %v587
    %v593 = vadd.s32 %v588, %v592
    %v594 = vadd.s32 %v593, 536870912
    %v595 = vshrl.u32 %v594, 30
    %v596 = vshll.u32 %v595, 30
    %v597 = vsub.s32 %v593, %v596
    %vm598 = vcmp.lt.s32.totalorder %v597, 0
    %v599 = vsub.s32 0, %v597
    %v600 = vsel %vm598, %v599, %v597
    %v601 = vclz %v600
    %v602 = vsub.s32 %v601, 2
    %vm603 = vcmp.gt.s32.totalorder 0, %v602
    %v604 = vsel %vm603, 0, %v602
    %v605 = vsub.s32 32, %v604
    %v606 = vshll.u32 %v597, %v604
    %v607 = vshrl.u32 %v589, %v605
    %v608 = vor.u32 %v606, %v607
    %v609 = vsub.s32 4294967266, %v604
    %v610 = vadd.s32 %v609, 127
    %v611 = vshll.u32 %v610, 23
    %v612 = vor.u32 4788187, %v611
    %v613 = vand.u32 2147483647, %v612
    %v615 = vcvt.s32.f32 %v608
    %v616 = vmul.f32 %v615, %v613
    %v617 = vxor.u32 %v616, 2147483648
    %v618 = vsel %vm497, %v617, %v616
    %v619 = vsub.s32 4, %v595
    %v620 = vsel %vm497, %v619, %v595
    %v621 = vsel %vm496, %v31, %v618
    %v622 = vsel %vm496, 0, %v620
    %v623 = vmul.f32 %v621, %v621
    %v624 = vmul.f32 %v623, -0.001358992
    %v625 = vadd.f32 %v624, 0.041655596
    %v626 = vmul.f32 %v623, %v625
    %v627 = vadd.f32 %v626, -0.4999988
    %v628 = vmul.f32 %v623, %v627
    %v629 = vadd.f32 1.0, %v628
    %v630 = vmul.f32 %v621, %v621
    %v631 = vmul.f32 %v630, -0.00019511016
    %v632 = vadd.f32 %v631, 0.008332121
    %v633 = vmul.f32 %v630, %v632
    %v634 = vadd.f32 %v633, -0.16666654
    %v635 = vmul.f32 %v630, %v634
    %v636 = vadd.f32 %v635, 1.0
    %v637 = vmul.f32 %v636, %v621
    %vm638 = vweird.f32 %v31
    %v639 = vadd.s32 %v622, 3
    %v640 = vand.u32 %v639, 3
    %vm641 = vcmp.lt.s32.totalorder %v640, 2
    %vm642 = vcmp.eq.s32.totalorder %v640, 0
    %v643 = vxor.u32 %v637, 2147483648
    %v644 = vsel %vm642, %v629, %v643
    %vm645 = vcmp.eq.s32.totalorder %v640, 2
    %v646 = vxor.u32 %v629, 2147483648
    %v647 = vsel %vm645, %v646, %v637
    %v648 = vsel %vm641, %v644, %v647
    %v649 = vsel %vm638, nan, %v648
    %652 = vrot.lane.b32.xlu0 %v185, 32
    %v653 = vpop.permute.xlu0 %652
    %654 = vrot.lane.b32.xlu0 %v339, 32
    %v655 = vpop.permute.xlu0 %654
    %660 = vrot.lane.b32.xlu0 %v494, 64
    %v661 = vpop.permute.xlu0 %660
    %662 = vrot.lane.b32.xlu0 %v649, 64
    %v663 = vpop.permute.xlu0 %662
    %666 = vrot.lane.b32.xlu0 %v494, 96
    %v667 = vpop.permute.xlu0 %666
    %668 = vrot.lane.b32.xlu0 %v649, 96
    %v669 = vpop.permute.xlu0 %668
    %vm672 = vcmask 261120
    %v673 = vsel %vm672, %v185, %v653
    %v674 = vsel %vm672, %v339, %v655
    %vm675 = vcmask 523264
    %v676 = vsel %vm675, %v673, %v661
    %v677 = vsel %vm675, %v674, %v663
    %vm678 = vcmask 785408
    %v679 = vsel %vm678, %v676, %v667
    %v680 = vsel %vm678, %v677, %v669
    %681 = vst [vmem:[#allocation2] sm:$0xff] %v679
    %682 = vst [vmem:[#allocation2 + $0x8] sm:$0xff] %v680
    // Predicated region
    $region10: #{tpu_custom_call.1} parent=1 // pred_check
      _
    $region11: #{tpu_custom_call.1} parent=1 // pred_check_branch
      %684 = sbr.rel (0) target = $region13
    $region12: #{tpu_custom_call.1} parent=1 // pred_region
      %686 = vsyncadd [#allocation3], 0
      %s687 = sshll.u32 [#allocation2], 4
      %s688 = int_to_ptr.vmem [resolvable:$true] %s687
      %s689 = sshll.u32 %s2, 4
      %s690 = int_to_ptr.hbm [resolvable:$true] %s689
      %695 = dma.vmem_to_hbm [thread:$0]  %s688, 256, %s690, [#allocation3], 128, 128, 8
    $region13: #{tpu_custom_call.1} parent=1 // pred_fallthru
      _
    // Predicated region
    $region14: #{tpu_custom_call.1} parent=1 // pred_check
      _
    $region15: #{tpu_custom_call.1} parent=1 // pred_check_branch
      %697 = sbr.rel (0) target = $region17
    $region16: #{tpu_custom_call.1} parent=1 // pred_region
      %699 = dma.done [#allocation3], 256
    $region17: #{tpu_custom_call.1} parent=1 // pred_fallthru
      _
    %700 = vsyncpa [#allocation3], 1

</llo_original>
